<compile_context>
chip_gen: v7x
topology: tpu7x:2x2x1
jax: 0.10.0
libtpu: 0.0.40
codegen_flags: <defaults>
</compile_context>

<pallas_src>
from functools import partial

import jax
import jax.numpy as jnp
from jax.experimental import pallas as pl
from jax.experimental.pallas import tpu as pltpu

EPS = 1e-5


# --------------------------------------------------------------------------
# Kernel
# --------------------------------------------------------------------------
def meta_layer_kernel(x_ref, w1_ref, b1_ref, w2_ref, b2_ref, o_ref):
    # Layer 1: folded Linear+BN -> ReLU   (Dropout = identity at inference)
    h = jnp.dot(x_ref[...], w1_ref[...], preferred_element_type=jnp.float32)
    h = jnp.maximum(h + b1_ref[...], 0.0)
    # Layer 2: folded Linear+BN -> ReLU
    h = jnp.dot(h.astype(jnp.bfloat16), w2_ref[...],
                preferred_element_type=jnp.float32)
    o_ref[...] = jnp.maximum(h + b2_ref[...], 0.0)


# --------------------------------------------------------------------------
# Wrapper
# --------------------------------------------------------------------------
@partial(jax.jit, static_argnames=("tb",))
def meta_layer_forward(x, kernel_params, *, tb=512):
    """x: [B, input_features] f32 -> [B, num_features//2] f32."""
    w1, b1, w2, b2 = kernel_params
    B, in_f = x.shape
    out_f = w2.shape[1]

    # Lane-dense output: pad the output feature dim to a multiple of 128
    # (unmasked vst; no-op for out_f == 128).
    out_pad = (-out_f) % 128
    if out_pad:
        w2 = jnp.pad(w2, ((0, 0), (0, out_pad)))
        b2 = jnp.pad(b2, ((0, 0), (0, out_pad)))
    out_fp = out_f + out_pad

    # Batch tile: multiple of 8 (sublane), capped at `tb`, clamped for tiny
    # batches.  Batch is padded up to a whole number of tiles.
    TB = min(tb, max(8, ((B + 7) // 8) * 8))
    B_pad = ((B + TB - 1) // TB) * TB
    if B_pad != B:
        x = jnp.pad(x, ((0, B_pad - B), (0, 0)))

    x = x.astype(jnp.bfloat16)

    out = pl.pallas_call(
        meta_layer_kernel,
        out_shape=jax.ShapeDtypeStruct((B_pad, out_fp), jnp.float32),
        grid=(B_pad // TB,),
        in_specs=[
            pl.BlockSpec((TB, in_f), lambda i: (i, 0)),   # x: batch-tiled
            pl.BlockSpec(w1.shape, lambda i: (0, 0)),     # VMEM-resident
            pl.BlockSpec(b1.shape, lambda i: (0, 0)),     # VMEM-resident
            pl.BlockSpec(w2.shape, lambda i: (0, 0)),     # VMEM-resident
            pl.BlockSpec(b2.shape, lambda i: (0, 0)),     # VMEM-resident
        ],
        out_specs=pl.BlockSpec((TB, out_fp), lambda i: (i, 0)),
        compiler_params=pltpu.CompilerParams(
            dimension_semantics=("parallel",)),
    )(x, w1, b1, w2, b2)

    return out[:B, :out_f]


# --------------------------------------------------------------------------
# Parameter construction (PyTorch layout) + BN folding
# --------------------------------------------------------------------------
def make_params(key, input_features=10, num_features=256):
    """Deterministic synthetic parameters in PyTorch shapes."""
    h1, h2 = num_features, num_features // 2
    ks = jax.random.split(key, 12)

    # Linear 1: PyTorch weight layout is (out, in).
    w1 = jax.random.normal(ks[0], (h1, input_features), jnp.float32) \
        * (1.0 / jnp.sqrt(input_features))
    b1 = 0.05 * jax.random.normal(ks[1], (h1,), jnp.float32)
    g1 = 1.0 + 0.1 * jax.random.normal(ks[2], (h1,), jnp.float32)
    be1 = 0.05 * jax.random.normal(ks[3], (h1,), jnp.float32)
    m1 = 0.1 * jax.random.normal(ks[4], (h1,), jnp.float32)
    v1 = 0.5 + jnp.abs(jax.random.normal(ks[5], (h1,), jnp.float32))

    # Linear 2
    w2 = jax.random.normal(ks[6], (h2, h1), jnp.float32) * (1.0 / jnp.sqrt(h1))
    b2 = 0.05 * jax.random.normal(ks[7], (h2,), jnp.float32)
    g2 = 1.0 + 0.1 * jax.random.normal(ks[8], (h2,), jnp.float32)
    be2 = 0.05 * jax.random.normal(ks[9], (h2,), jnp.float32)
    m2 = 0.1 * jax.random.normal(ks[10], (h2,), jnp.float32)
    v2 = 0.5 + jnp.abs(jax.random.normal(ks[11], (h2,), jnp.float32))

    return (w1, b1, g1, be1, m1, v1, w2, b2, g2, be2, m2, v2)


def fold_params(raw):
    """Fold inference BatchNorm into the Linear weights/biases (host-side)."""
    (w1, b1, g1, be1, m1, v1, w2, b2, g2, be2, m2, v2) = raw

    s1 = g1 * jax.lax.rsqrt(v1 + EPS)
    w1f = (w1.T * s1[None, :]).astype(jnp.bfloat16)            # [in, h1] bf16
    b1f = ((b1 - m1) * s1 + be1).reshape(1, -1).astype(jnp.float32)

    s2 = g2 * jax.lax.rsqrt(v2 + EPS)
    w2f = (w2.T * s2[None, :]).astype(jnp.bfloat16)            # [h1, h2] bf16
    b2f = ((b2 - m2) * s2 + be2).reshape(1, -1).astype(jnp.float32)

    return (w1f, b1f, w2f, b2f)


def reference_forward(x, raw):
    """Pure-JAX f32 reference with the original (unfolded) BN math."""
    (w1, b1, g1, be1, m1, v1, w2, b2, g2, be2, m2, v2) = raw
    h = x @ w1.T + b1
    h = (h - m1) / jnp.sqrt(v1 + EPS) * g1 + be1
    h = jnp.maximum(h, 0.0)
    h = h @ w2.T + b2
    h = (h - m2) / jnp.sqrt(v2 + EPS) * g2 + be2
    return jnp.maximum(h, 0.0)


# --------------------------------------------------------------------------
# Main
# --------------------------------------------------------------------------
if __name__ == "__main__":
    B, IN_F, H = 8, 10, 256
    key = jax.random.PRNGKey(0)
    kx, kp = jax.random.split(key)

    raw_params = make_params(kp, input_features=IN_F, num_features=H)
    kparams = fold_params(raw_params)

    # Small test (single grid step).
    x = jax.random.normal(kx, (B, IN_F), jnp.float32)
    out = jax.block_until_ready(meta_layer_forward(x, kparams))
    ref = reference_forward(x, raw_params)
    assert out.shape == (B, H // 2), out.shape
    assert jnp.allclose(out, ref, atol=1e-1, rtol=1e-1), \
        float(jnp.max(jnp.abs(out - ref)))

    # Multi-step grid test (exercises batch tiling + batch padding).
    B2 = 520
    x2 = jax.random.normal(jax.random.PRNGKey(1), (B2, IN_F), jnp.float32)
    out2 = jax.block_until_ready(meta_layer_forward(x2, kparams, tb=128))
    ref2 = reference_forward(x2, raw_params)
    assert out2.shape == (B2, H // 2), out2.shape
    assert jnp.allclose(out2, ref2, atol=1e-1, rtol=1e-1), \
        float(jnp.max(jnp.abs(out2 - ref2)))

    print("KERNEL_OK")
</pallas_src>

<mosaic_0001>
module attributes {stable_mosaic.version = 11 : i64} {
  func.func @meta_layer_kernel(%arg0: i32, %arg1: memref<8x10xbf16, #tpu.memory_space<vmem>>, %arg2: memref<10x256xbf16, #tpu.memory_space<vmem>>, %arg3: memref<1x256xf32, #tpu.memory_space<vmem>>, %arg4: memref<256x128xbf16, #tpu.memory_space<vmem>>, %arg5: memref<1x128xf32, #tpu.memory_space<vmem>>, %arg6: memref<8x128xf32, #tpu.memory_space<vmem>>) attributes {dimension_semantics = [#tpu.dimension_semantics<parallel>], iteration_bounds = array<i64: 1>, scalar_prefetch = 0 : i64, scratch_operands = 0 : i64, tpu.core_type = #tpu.core_type<tc>, window_params = [{transform_indices = @transform_0, window_bounds = array<i64: 8, 10>}, {pipeline_mode = #tpu.pipeline_mode<synchronous>, transform_indices = @transform_1, window_bounds = array<i64: 10, 256>}, {pipeline_mode = #tpu.pipeline_mode<synchronous>, transform_indices = @transform_2, window_bounds = array<i64: 1, 256>}, {pipeline_mode = #tpu.pipeline_mode<synchronous>, transform_indices = @transform_3, window_bounds = array<i64: 256, 128>}, {pipeline_mode = #tpu.pipeline_mode<synchronous>, transform_indices = @transform_4, window_bounds = array<i64: 1, 128>}, {transform_indices = @transform_5, window_bounds = array<i64: 8, 128>}]} {
    %c0 = arith.constant 0 : index
    %c0_0 = arith.constant 0 : index
    %0 = vector.load %arg1[%c0, %c0_0] : memref<8x10xbf16, #tpu.memory_space<vmem>>, vector<8x10xbf16>
    %c0_1 = arith.constant 0 : index
    %c0_2 = arith.constant 0 : index
    %1 = vector.load %arg2[%c0_1, %c0_2] : memref<10x256xbf16, #tpu.memory_space<vmem>>, vector<10x256xbf16>
    %cst = arith.constant dense<0.000000e+00> : vector<8x256xf32>
    %2 = tpu.matmul %0, %1, %cst {dimension_numbers = #tpu.dot_dimension_numbers<[1], [0], [0], [1], [0, 0, 1, 1], [], []>} : vector<8x10xbf16>, vector<10x256xbf16>, vector<8x256xf32> -> vector<8x256xf32>
    %c0_3 = arith.constant 0 : index
    %c0_4 = arith.constant 0 : index
    %3 = vector.load %arg3[%c0_3, %c0_4] : memref<1x256xf32, #tpu.memory_space<vmem>>, vector<1x256xf32>
    %4 = vector.broadcast %3 : vector<1x256xf32> to vector<8x256xf32>
    %5 = arith.addf %2, %4 : vector<8x256xf32>
    %cst_5 = arith.constant 0.000000e+00 : f32
    %6 = vector.broadcast %cst_5 : f32 to vector<8x256xf32>
    %7 = arith.maximumf %5, %6 : vector<8x256xf32>
    %8 = arith.truncf %7 : vector<8x256xf32> to vector<8x256xbf16>
    %c0_6 = arith.constant 0 : index
    %c0_7 = arith.constant 0 : index
    %9 = vector.load %arg4[%c0_6, %c0_7] : memref<256x128xbf16, #tpu.memory_space<vmem>>, vector<256x128xbf16>
    %cst_8 = arith.constant dense<0.000000e+00> : vector<8x128xf32>
    %10 = tpu.matmul %8, %9, %cst_8 {dimension_numbers = #tpu.dot_dimension_numbers<[1], [0], [0], [1], [0, 0, 1, 1], [], []>} : vector<8x256xbf16>, vector<256x128xbf16>, vector<8x128xf32> -> vector<8x128xf32>
    %c0_9 = arith.constant 0 : index
    %c0_10 = arith.constant 0 : index
    %11 = vector.load %arg5[%c0_9, %c0_10] : memref<1x128xf32, #tpu.memory_space<vmem>>, vector<1x128xf32>
    %12 = vector.broadcast %11 : vector<1x128xf32> to vector<8x128xf32>
    %13 = arith.addf %10, %12 : vector<8x128xf32>
    %cst_11 = arith.constant 0.000000e+00 : f32
    %14 = vector.broadcast %cst_11 : f32 to vector<8x128xf32>
    %15 = arith.maximumf %13, %14 : vector<8x128xf32>
    %c0_12 = arith.constant 0 : index
    %c0_13 = arith.constant 0 : index
    %16 = vector.load %arg6[%c0_12, %c0_13] : memref<8x128xf32, #tpu.memory_space<vmem>>, vector<8x128xf32>
    tpu.vector_store %arg6[%c0_12, %c0_13], %15 {strides = array<i32>} : memref<8x128xf32, #tpu.memory_space<vmem>>, vector<8x128xf32>,
    return
  }
  func.func @transform_0(%arg0: i32) -> (i32, i32) {
    %c0_i32 = arith.constant 0 : i32
    %c0_i32_0 = arith.constant 0 : i32
    return %arg0, %c0_i32 : i32, i32
  }
  func.func @transform_1(%arg0: i32) -> (i32, i32) {
    %c0_i32 = arith.constant 0 : i32
    %c0_i32_0 = arith.constant 0 : i32
    %c0_i32_1 = arith.constant 0 : i32
    return %c0_i32, %c0_i32_0 : i32, i32
  }
  func.func @transform_2(%arg0: i32) -> (i32, i32) {
    %c0_i32 = arith.constant 0 : i32
    %c0_i32_0 = arith.constant 0 : i32
    %c0_i32_1 = arith.constant 0 : i32
    return %c0_i32, %c0_i32_0 : i32, i32
  }
  func.func @transform_3(%arg0: i32) -> (i32, i32) {
    %c0_i32 = arith.constant 0 : i32
    %c0_i32_0 = arith.constant 0 : i32
    %c0_i32_1 = arith.constant 0 : i32
    return %c0_i32, %c0_i32_0 : i32, i32
  }
  func.func @transform_4(%arg0: i32) -> (i32, i32) {
    %c0_i32 = arith.constant 0 : i32
    %c0_i32_0 = arith.constant 0 : i32
    %c0_i32_1 = arith.constant 0 : i32
    return %c0_i32, %c0_i32_0 : i32, i32
  }
  func.func @transform_5(%arg0: i32) -> (i32, i32) {
    %c0_i32 = arith.constant 0 : i32
    %c0_i32_0 = arith.constant 0 : i32
    return %arg0, %c0_i32 : i32, i32
  }
}

</mosaic_0001>

<llo_original>
// kernel: meta_layer_forward.1
$region0: #{meta_layer_forward.1}
  #allocation0 [shape = 'u32[]', space=smem, size = 0x4, offset = 0x4, fixed_abs, tag = 'smem constant byte address 0x4 - core index']
  #allocation1 [shape = 'u32[144,128]{1,0:T(1,128)}', space=vmem, size = 0x12000, scoped, tag = 'internal scratch']
  %s0 = inlined_call_operand.vmem [shape: bf16[8,10], index: 0, kind: input, shape index: {}]
  %s1 = inlined_call_operand.hbm [shape: bf16[10,256], index: 1, kind: input, shape index: {}]
  %s2 = inlined_call_operand.vmem [shape: f32[1,256], index: 2, kind: input, shape index: {}]
  %s3 = inlined_call_operand.hbm [shape: bf16[256,128], index: 3, kind: input, shape index: {}]
  %s4 = inlined_call_operand.vmem [shape: f32[1,128], index: 4, kind: input, shape index: {}]
  %s5 = inlined_call_operand.hbm [shape: f32[8,128], index: 5, kind: output, shape index: {}]
  %s6 = sld [smem:[#allocation0]]
  $region38: #{meta_layer_forward.1} parent=0
    _
  %s8 = ssub.s32 1, %s6
  %s9 = scalar_select 0, %s8, %s6
  $region1: #{meta_layer_forward.1} parent=0
    #allocation2 [shape = 'u8[8192]{0}', space=vmem, size = 0x2000, scoped, tag = 'input window, operand 1, single buffered']
    #allocation3 [shape = 's32[1]{0}', space=sflag, size = 0x4, scoped, tag = 'scoped memory for meta_layer_forward.1']
    #allocation4 [shape = 's32[1]{0}', space=sflag, size = 0x4, scoped, tag = 'scoped memory for meta_layer_forward.1']
    #allocation5 [shape = 'u8[65536]{0}', space=vmem, size = 0x10000, scoped, tag = 'input window, operand 3, single buffered']
    #allocation6 [shape = 's32[1]{0}', space=sflag, size = 0x4, scoped, tag = 'scoped memory for meta_layer_forward.1']
    #allocation7 [shape = 'u8[4096]{0}', space=vmem, size = 0x1000, scoped, tag = 'output window, operand 0, single buffered']
    %10 = vsyncpa [#allocation3], 0
    %11 = vsyncpa [#allocation6], 0
    %12 = vsyncpa [#allocation4], 0
    // Predicated region
    $region2: #{meta_layer_forward.1} parent=1 // pred_check
      _
    $region3: #{meta_layer_forward.1} parent=1 // pred_check_branch
      %14 = sbr.rel (0) target = $region5
    $region4: #{meta_layer_forward.1} parent=1 // pred_region
      _
    $region5: #{meta_layer_forward.1} parent=1 // pred_fallthru
      _
    // Predicated region
    $region6: #{meta_layer_forward.1} parent=1 // pred_check
      _
    $region7: #{meta_layer_forward.1} parent=1 // pred_check_branch
      %16 = sbr.rel (0) target = $region9
    $region8: #{meta_layer_forward.1} parent=1 // pred_region
      %s18 = ssub.s32 256, 256
      %19 = vsyncadd [#allocation3], %s18
      %s20 = sshll.u32 [#allocation2], 4
      %s21 = int_to_ptr.vmem [resolvable:$true] %s20
      %26 = dma.hbm_to_vmem [thread:$0]  %s1, 256, %s21, [#allocation3], 128, 128, 8
    $region9: #{meta_layer_forward.1} parent=1 // pred_fallthru
      _
    // Predicated region
    $region10: #{meta_layer_forward.1} parent=1 // pred_check
      _
    $region11: #{meta_layer_forward.1} parent=1 // pred_check_branch
      %28 = sbr.rel (0) target = $region13
    $region12: #{meta_layer_forward.1} parent=1 // pred_region
      _
    $region13: #{meta_layer_forward.1} parent=1 // pred_fallthru
      _
    // Predicated region
    $region14: #{meta_layer_forward.1} parent=1 // pred_check
      _
    $region15: #{meta_layer_forward.1} parent=1 // pred_check_branch
      %30 = sbr.rel (0) target = $region17
    $region16: #{meta_layer_forward.1} parent=1 // pred_region
      %s32 = ssub.s32 2048, 2048
      %33 = vsyncadd [#allocation6], %s32
      %s34 = sshll.u32 [#allocation5], 4
      %s35 = int_to_ptr.vmem [resolvable:$true] %s34
      %40 = dma.hbm_to_vmem [thread:$0]  %s3, 2048, %s35, [#allocation6], 64, 64, 4
    $region17: #{meta_layer_forward.1} parent=1 // pred_fallthru
      _
    // Predicated region
    $region18: #{meta_layer_forward.1} parent=1 // pred_check
      _
    $region19: #{meta_layer_forward.1} parent=1 // pred_check_branch
      %42 = sbr.rel (0) target = $region21
    $region20: #{meta_layer_forward.1} parent=1 // pred_region
      _
    $region21: #{meta_layer_forward.1} parent=1 // pred_fallthru
      _
    // Predicated region
    $region22: #{meta_layer_forward.1} parent=1 // pred_check
      _
    $region23: #{meta_layer_forward.1} parent=1 // pred_check_branch
      %44 = sbr.rel (0) target = $region25
    $region24: #{meta_layer_forward.1} parent=1 // pred_region
      %45 = dma.done [#allocation3], 256
    $region25: #{meta_layer_forward.1} parent=1 // pred_fallthru
      _
    // Predicated region
    $region26: #{meta_layer_forward.1} parent=1 // pred_check
      _
    $region27: #{meta_layer_forward.1} parent=1 // pred_check_branch
      %47 = sbr.rel (0) target = $region29
    $region28: #{meta_layer_forward.1} parent=1 // pred_region
      %48 = dma.done [#allocation6], 2048
    $region29: #{meta_layer_forward.1} parent=1 // pred_fallthru
      _
    %v50 = vld [vmem:[%s0] sm:$0xf]
    %v51 = vld [vmem:[#allocation2] sm:$0xff]
    %v52 = vld [vmem:[#allocation2 + $0x8] sm:$0x11]
    %v53 = vld [vmem:[%s2] sm:$0x3]
    %v55 = vlaneseq
    %v56 = vshrl.u32 %v55, 7
    %v57 = vsub.s32 0, %v56
    %v58 = vrot.slane %v53, %v57
    %v59 = vlaneseq
    %v60 = vshrl.u32 %v59, 7
    %v61 = vsub.s32 1, %v60
    %v62 = vrot.slane %v53, %v61
    %v67 = vunpack.c.l.b16 %v51
    %v68 = vunpack.c.h.b16 %v51
    %v69 = vunpack.c.l.b16 %v52
    %v70 = vunpack.c.h.b16 %v52
    %v71 = vpack.c.b16 %v69, %v67
    %v72 = vpack.c.b16 %v70, %v68
    %vm73 = vcmask 80896
    %v75 = vsel %vm73, %v50, 0
    %vm77 = vcmask 1044480
    %v79 = vsel %vm77, %v71, 0
    %v82 = vsel %vm77, %v72, 0
    %84 = vmatprep.subr.bf16.mxu0 %v82
    %85 = vmatpush1.bf16.msra.mxu0 %v79
    %86 = vmatprep.subr.bf16.mxu0 0
    %87 = vmatpush1.bf16.msra.mxu0 0
    %88 = vmatprep.subr.bf16.mxu0 0
    %89 = vmatpush1.bf16.msra.mxu0 0
    %90 = vmatprep.subr.bf16.mxu0 0
    %91 = vmatpush1.bf16.msra.mxu0 0
    %92 = vmatprep.subr.bf16.mxu0 0
    %93 = vmatpush1.bf16.msra.mxu0 0
    %94 = vmatprep.subr.bf16.mxu0 0
    %95 = vmatpush1.bf16.msra.mxu0 0
    %96 = vmatprep.subr.bf16.mxu0 0
    %97 = vmatpush1.bf16.msra.mxu0 0
    %98 = vmatprep.subr.bf16.mxu0 0
    %99 = vmatpush1.bf16.msra.mxu0 0
    %100 = vmatprep.subr.bf16.mxu0 0
    %101 = vmatpush1.bf16.msra.mxu0 0
    %102 = vmatprep.subr.bf16.mxu0 0
    %103 = vmatpush1.bf16.msra.mxu0 0
    %104 = vmatprep.subr.bf16.mxu0 0
    %105 = vmatpush1.bf16.msra.mxu0 0
    %106 = vmatprep.subr.bf16.mxu0 0
    %107 = vmatpush1.bf16.msra.mxu0 0
    %108 = vmatprep.subr.bf16.mxu0 0
    %109 = vmatpush1.bf16.msra.mxu0 0
    %110 = vmatprep.subr.bf16.mxu0 0
    %111 = vmatpush1.bf16.msra.mxu0 0
    %112 = vmatprep.subr.bf16.mxu0 0
    %113 = vmatpush1.bf16.msra.mxu0 0
    %114 = vmatprep.subr.bf16.mxu0 0
    %115 = vmatpush1.bf16.msra.mxu0 0
    %116 = vmatprep.mubr.bf16.mxu0 0
    %117 = vmatmul.mubr.bf16.gmra.mrb[0].mxu0 %v75
    %v118 = vpop.f32.mrb[0].mxu0
    %v119 = vadd.f32 %v58, %v118
    %v120 = vpop.f32.mrb[0].mxu0
    %v121 = vadd.f32 %v62, %v120
    %v122 = vpop.f32.mrb[0].mxu0
    %v123 = vpop.f32.mrb[0].mxu0
    %124 = vdwg.mxu0
    %v125 = vmax.f32 %v119, 0.0
    %v126 = vmax.f32 %v121, 0.0
    %v127 = vpack.c.bf16 %v125, %v125
    %v128 = vpack.c.bf16 %v126, %v126
    %v129 = vld [vmem:[#allocation5] sm:$0xf]
    %v130 = vld [vmem:[#allocation5 + $0x4] sm:$0xf]
    %v131 = vld [vmem:[#allocation5 + $0x8] sm:$0xf]
    %v132 = vld [vmem:[#allocation5 + $0xc] sm:$0xf]
    %v133 = vld [vmem:[#allocation5 + $0x10] sm:$0xf]
    %v134 = vld [vmem:[#allocation5 + $0x14] sm:$0xf]
    %v135 = vld [vmem:[#allocation5 + $0x18] sm:$0xf]
    %v136 = vld [vmem:[#allocation5 + $0x1c] sm:$0xf]
    %v137 = vld [vmem:[#allocation5 + $0x20] sm:$0xf]
    %v138 = vld [vmem:[#allocation5 + $0x24] sm:$0xf]
    %v139 = vld [vmem:[#allocation5 + $0x28] sm:$0xf]
    %v140 = vld [vmem:[#allocation5 + $0x2c] sm:$0xf]
    %v141 = vld [vmem:[#allocation5 + $0x30] sm:$0xf]
    %v142 = vld [vmem:[#allocation5 + $0x34] sm:$0xf]
    %v143 = vld [vmem:[#allocation5 + $0x38] sm:$0xf]
    %v144 = vld [vmem:[#allocation5 + $0x3c] sm:$0xf]
    %v145 = vld [vmem:[#allocation5 + $0x40] sm:$0xf]
    %v146 = vld [vmem:[#allocation5 + $0x44] sm:$0xf]
    %v147 = vld [vmem:[#allocation5 + $0x48] sm:$0xf]
    %v148 = vld [vmem:[#allocation5 + $0x4c] sm:$0xf]
    %v149 = vld [vmem:[#allocation5 + $0x50] sm:$0xf]
    %v150 = vld [vmem:[#allocation5 + $0x54] sm:$0xf]
    %v151 = vld [vmem:[#allocation5 + $0x58] sm:$0xf]
    %v152 = vld [vmem:[#allocation5 + $0x5c] sm:$0xf]
    %v153 = vld [vmem:[#allocation5 + $0x60] sm:$0xf]
    %v154 = vld [vmem:[#allocation5 + $0x64] sm:$0xf]
    %v155 = vld [vmem:[#allocation5 + $0x68] sm:$0xf]
    %v156 = vld [vmem:[#allocation5 + $0x6c] sm:$0xf]
    %v157 = vld [vmem:[#allocation5 + $0x70] sm:$0xf]
    %v158 = vld [vmem:[#allocation5 + $0x74] sm:$0xf]
    %v159 = vld [vmem:[#allocation5 + $0x78] sm:$0xf]
    %v160 = vld [vmem:[#allocation5 + $0x7c] sm:$0xf]
    %v161 = vld [vmem:[%s4] sm:$0x1]
    %v163 = vlaneseq
    %v164 = vshrl.u32 %v163, 7
    %v165 = vsub.s32 0, %v164
    %v166 = vrot.slane %v161, %v165
    %v200 = vunpack.c.l.b16 %v129
    %v201 = vunpack.c.l.b16 %v130
    %v202 = vunpack.c.l.b16 %v131
    %v203 = vunpack.c.l.b16 %v132
    %v204 = vunpack.c.l.b16 %v133
    %v205 = vunpack.c.l.b16 %v134
    %v206 = vunpack.c.l.b16 %v135
    %v207 = vunpack.c.l.b16 %v136
    %v208 = vunpack.c.l.b16 %v137
    %v209 = vunpack.c.l.b16 %v138
    %v210 = vunpack.c.l.b16 %v139
    %v211 = vunpack.c.l.b16 %v140
    %v212 = vunpack.c.l.b16 %v141
    %v213 = vunpack.c.l.b16 %v142
    %v214 = vunpack.c.l.b16 %v143
    %v215 = vunpack.c.l.b16 %v144
    %v216 = vunpack.c.l.b16 %v145
    %v217 = vunpack.c.l.b16 %v146
    %v218 = vunpack.c.l.b16 %v147
    %v219 = vunpack.c.l.b16 %v148
    %v220 = vunpack.c.l.b16 %v149
    %v221 = vunpack.c.l.b16 %v150
    %v222 = vunpack.c.l.b16 %v151
    %v223 = vunpack.c.l.b16 %v152
    %v224 = vunpack.c.l.b16 %v153
    %v225 = vunpack.c.l.b16 %v154
    %v226 = vunpack.c.l.b16 %v155
    %v227 = vunpack.c.l.b16 %v156
    %v228 = vunpack.c.l.b16 %v157
    %v229 = vunpack.c.l.b16 %v158
    %v230 = vunpack.c.l.b16 %v159
    %v231 = vunpack.c.l.b16 %v160
    %v232 = vpack.c.b16 %v201, %v200
    %v233 = vpack.c.b16 %v203, %v202
    %v234 = vpack.c.b16 %v205, %v204
    %v235 = vpack.c.b16 %v207, %v206
    %v236 = vpack.c.b16 %v209, %v208
    %v237 = vpack.c.b16 %v211, %v210
    %v238 = vpack.c.b16 %v213, %v212
    %v239 = vpack.c.b16 %v215, %v214
    %v240 = vpack.c.b16 %v217, %v216
    %v241 = vpack.c.b16 %v219, %v218
    %v242 = vpack.c.b16 %v221, %v220
    %v243 = vpack.c.b16 %v223, %v222
    %v244 = vpack.c.b16 %v225, %v224
    %v245 = vpack.c.b16 %v227, %v226
    %v246 = vpack.c.b16 %v229, %v228
    %v247 = vpack.c.b16 %v231, %v230
    %264 = vmatprep.subr.bf16.mxu0 0
    %265 = vmatpush1.bf16.msra.mxu0 %v232
    %266 = vmatprep.subr.bf16.mxu0 0
    %267 = vmatpush1.bf16.msra.mxu0 %v233
    %268 = vmatprep.subr.bf16.mxu0 0
    %269 = vmatpush1.bf16.msra.mxu0 %v234
    %270 = vmatprep.subr.bf16.mxu0 0
    %271 = vmatpush1.bf16.msra.mxu0 %v235
    %272 = vmatprep.subr.bf16.mxu0 0
    %273 = vmatpush1.bf16.msra.mxu0 %v236
    %274 = vmatprep.subr.bf16.mxu0 0
    %275 = vmatpush1.bf16.msra.mxu0 %v237
    %276 = vmatprep.subr.bf16.mxu0 0
    %277 = vmatpush1.bf16.msra.mxu0 %v238
    %278 = vmatprep.subr.bf16.mxu0 0
    %279 = vmatpush1.bf16.msra.mxu0 %v239
    %280 = vmatprep.subr.bf16.mxu0 0
    %281 = vmatpush1.bf16.msra.mxu0 %v240
    %282 = vmatprep.subr.bf16.mxu0 0
    %283 = vmatpush1.bf16.msra.mxu0 %v241
    %284 = vmatprep.subr.bf16.mxu0 0
    %285 = vmatpush1.bf16.msra.mxu0 %v242
    %286 = vmatprep.subr.bf16.mxu0 0
    %287 = vmatpush1.bf16.msra.mxu0 %v243
    %288 = vmatprep.subr.bf16.mxu0 0
    %289 = vmatpush1.bf16.msra.mxu0 %v244
    %290 = vmatprep.subr.bf16.mxu0 0
    %291 = vmatpush1.bf16.msra.mxu0 %v245
    %292 = vmatprep.subr.bf16.mxu0 0
    %293 = vmatpush1.bf16.msra.mxu0 %v246
    %294 = vmatprep.subr.bf16.mxu0 0
    %295 = vmatpush1.bf16.msra.mxu0 %v247
    %296 = vmatprep.mubr.bf16.mxu0 %v128
    %297 = vmatmul.mubr.bf16.gmra.mrb[0].mxu0 %v127
    %v298 = vpop.f32.mrb[0].mxu0
    %v299 = vadd.f32 %v166, %v298
    %v300 = vpop.f32.mrb[0].mxu0
    %v301 = vpop.f32.mrb[0].mxu0
    %v302 = vpop.f32.mrb[0].mxu0
    %303 = vdwg.mxu0
    %v304 = vmax.f32 %v299, 0.0
    %305 = vst [vmem:[#allocation7] sm:$0xff] %v304
    // Predicated region
    $region30: #{meta_layer_forward.1} parent=1 // pred_check
      _
    $region31: #{meta_layer_forward.1} parent=1 // pred_check_branch
      %307 = sbr.rel (0) target = $region33
    $region32: #{meta_layer_forward.1} parent=1 // pred_region
      %s309 = ssub.s32 128, 128
      %310 = vsyncadd [#allocation4], %s309
      %s312 = sshll.u32 [#allocation7], 4
      %s313 = int_to_ptr.vmem [resolvable:$true] %s312
      %315 = dma.vmem_to_hbm [thread:$0]  %s313, 128, %s5, [#allocation4]
    $region33: #{meta_layer_forward.1} parent=1 // pred_fallthru
      _
    // Predicated region
    $region34: #{meta_layer_forward.1} parent=1 // pred_check
      _
    $region35: #{meta_layer_forward.1} parent=1 // pred_check_branch
      %317 = sbr.rel (0) target = $region37
    $region36: #{meta_layer_forward.1} parent=1 // pred_region
      %318 = dma.done [#allocation4], 128
    $region37: #{meta_layer_forward.1} parent=1 // pred_fallthru
      _
    %319 = vsyncpa [#allocation3], 1
    %320 = vsyncpa [#allocation6], 1
    %321 = vsyncpa [#allocation4], 1

</llo_original>
